<compile_context>
chip_gen: v5e
topology: v5e:2x2
jax: 0.10.0
libtpu: 0.0.40
codegen_flags: <defaults>
</compile_context>

<pallas_src>
import functools

import jax
import jax.numpy as jnp
from jax import lax
from jax.experimental import pallas as pl
from jax.experimental.pallas import tpu as pltpu


def _round_up(x, m):
    return (x + m - 1) // m * m


def _pick_chunk(T, max_chunk=16):
    """Largest chunk size <= max_chunk that divides T (avoids tail masking)."""
    for c in range(min(T, max_chunk), 0, -1):
        if T % c == 0:
            return c
    return 1


def rnn_seq_kernel(xproj_ref, wh_ref, h0_ref, out_ref, hT_ref, *, chunk, h_pad):
    """One grid step == `chunk` RNN time steps.

    xproj_ref : (chunk, B_pad, H_pad+O_pad) precomputed x@Wx + b (streamed)
    wh_ref    : (H_pad, H_pad+O_pad)        fused hidden->[hidden|output] weights (resident)
    h0_ref    : (B_pad, H_pad)              initial hidden (resident)
    out_ref   : (chunk, B_pad, O_pad)       per-step log-softmax output
    hT_ref    : (B_pad, H_pad)              carried / final hidden (constant block idx)
    """
    c = pl.program_id(0)

    @pl.when(c == 0)
    def _():
        hT_ref[...] = h0_ref[...]

    wh = wh_ref[...]  # resident fused [W_hidden | W_output] RHS

    def step(t, h):
        # Serial critical path: single MXU pass on the recurrent term only.
        fused = xproj_ref[t] + jnp.dot(h, wh, preferred_element_type=jnp.float32)
        new_h = fused[:, :h_pad]      # lane-aligned slice -> next hidden
        logits = fused[:, h_pad:]     # lane-aligned slice -> output logits
        # Padded output lanes already carry -1e30 from the bias fold, so the
        # max/sum reductions ignore them; no iota/where needed here.
        m = jnp.max(logits, axis=1, keepdims=True)
        e = jnp.exp(logits - m)
        lse = jnp.log(jnp.sum(e, axis=1, keepdims=True))
        out_ref[t] = (logits - m - lse).astype(out_ref.dtype)
        return new_h

    h = lax.fori_loop(0, chunk, step, hT_ref[...], unroll=True)
    hT_ref[...] = h  # one store per chunk, not per step


def prepare_params(w_i2h, b_i2h, w_i2o, b_i2o, input_size, hidden_size, output_size):
    """One-time weight packing (done OUTSIDE the step loop).

    PyTorch layout: w_i2h (H, I+H), w_i2o (O, I+H), biases (H,), (O,).
    Returns Wx (I, H_pad+O_pad), Wh (H_pad, H_pad+O_pad), b (1, H_pad+O_pad)
    with H and O each zero-padded to 128 lanes. Padded hidden weight
    columns/rows are zero so padded hidden lanes stay exactly zero through
    the recurrence; padded OUTPUT bias lanes are -1e30 so the log-softmax
    mask is pre-folded into the bias.
    """
    I, H, O = input_size, hidden_size, output_size
    H_pad = _round_up(H, 128)
    O_pad = _round_up(O, 128)

    wx_h = w_i2h[:, :I].T    # (I, H)
    wh_h = w_i2h[:, I:].T    # (H, H)
    wx_o = w_i2o[:, :I].T    # (I, O)
    wh_o = w_i2o[:, I:].T    # (H, O)

    wx = jnp.zeros((I, H_pad + O_pad), jnp.float32)
    wx = wx.at[:, :H].set(wx_h)
    wx = wx.at[:, H_pad:H_pad + O].set(wx_o)

    wh = jnp.zeros((H_pad, H_pad + O_pad), jnp.float32)
    wh = wh.at[:H, :H].set(wh_h)
    wh = wh.at[:H, H_pad:H_pad + O].set(wh_o)

    b = jnp.zeros((1, H_pad + O_pad), jnp.float32)
    b = b.at[0, :H].set(b_i2h)
    b = b.at[0, H_pad:H_pad + O].set(b_i2o)
    b = b.at[0, H_pad + O:].set(-1e30)   # mask padded output lanes once, here
    return wx, wh, b


@functools.partial(jax.jit, static_argnames=("hidden_size", "output_size", "max_chunk"))
def rnn_sequence(x_seq, h0, wx, wh, b, *, hidden_size, output_size, max_chunk=16):
    """Run T RNN steps in ONE pallas_call (chunked in-kernel time loop).

    x_seq: (T, B, I)   h0: (B, H)
    Returns (out_seq (T, B, O) log-softmax per step, h_T (B, H)).
    """
    T, B, I = x_seq.shape
    H_pad = wh.shape[0]
    HO_pad = wx.shape[1]
    O_pad = HO_pad - H_pad
    B_pad = _round_up(max(B, 8), 8)
    chunk = _pick_chunk(T, max_chunk)
    num_chunks = T // chunk

    x_p = jnp.zeros((T, B_pad, I), jnp.float32).at[:, :B, :].set(x_seq)
    h0_p = jnp.zeros((B_pad, H_pad), jnp.float32).at[:B, :hidden_size].set(h0)

    # Non-recurrent input projection hoisted off the serial chain: one big
    # (T*B_pad, I) x (I, HO_pad) matmul, bias (incl. output-lane mask) folded in.
    xproj = (x_p.reshape(T * B_pad, I) @ wx + b).reshape(T, B_pad, HO_pad)

    kernel = functools.partial(rnn_seq_kernel, chunk=chunk, h_pad=H_pad)

    out_p, hT_p = pl.pallas_call(
        kernel,
        out_shape=(
            jax.ShapeDtypeStruct((T, B_pad, O_pad), jnp.float32),
            jax.ShapeDtypeStruct((B_pad, H_pad), jnp.float32),
        ),
        grid_spec=pltpu.PrefetchScalarGridSpec(
            num_scalar_prefetch=0,
            grid=(num_chunks,),
            in_specs=[
                pl.BlockSpec((chunk, B_pad, HO_pad), lambda c: (c, 0, 0)),  # xproj (streamed)
                pl.BlockSpec((H_pad, HO_pad), lambda c: (0, 0)),            # Wh (resident)
                pl.BlockSpec((B_pad, H_pad), lambda c: (0, 0)),             # h0 (resident)
            ],
            out_specs=(
                pl.BlockSpec((chunk, B_pad, O_pad), lambda c: (c, 0, 0)),   # lane-dense out
                pl.BlockSpec((B_pad, H_pad), lambda c: (0, 0)),             # carried hidden
            ),
        ),
        compiler_params=pltpu.CompilerParams(
            dimension_semantics=("arbitrary",),   # sequential recurrence over chunks
        ),
    )(xproj, wh, h0_p)

    return out_p[:, :B, :output_size], hT_p[:B, :hidden_size]


def rnn_forward(x, h, wx, wh, b, *, hidden_size, output_size):
    """Single step, matching RNN.forward(input, hidden) -> (output, hidden)."""
    out_seq, h_new = rnn_sequence(x[None], h, wx, wh, b,
                                  hidden_size=hidden_size, output_size=output_size)
    return out_seq[0], h_new


def init_params(key, input_size, hidden_size, output_size):
    """Deterministic uniform init, PyTorch nn.Linear-style bounds."""
    k1, k2, k3, k4 = jax.random.split(key, 4)
    fan_in = input_size + hidden_size
    bound = 1.0 / (fan_in ** 0.5)
    w_i2h = jax.random.uniform(k1, (hidden_size, fan_in), jnp.float32, -bound, bound)
    b_i2h = jax.random.uniform(k2, (hidden_size,), jnp.float32, -bound, bound)
    w_i2o = jax.random.uniform(k3, (output_size, fan_in), jnp.float32, -bound, bound)
    b_i2o = jax.random.uniform(k4, (output_size,), jnp.float32, -bound, bound)
    return w_i2h, b_i2h, w_i2o, b_i2o


if __name__ == "__main__":
    B = 2
    T = 8
    INPUT_SIZE = 16
    HIDDEN_SIZE = 32
    OUTPUT_SIZE = 8

    key = jax.random.PRNGKey(0)
    kx, kp = jax.random.split(key)

    x_seq = jax.random.normal(kx, (T, B, INPUT_SIZE), jnp.float32)
    h0 = jnp.zeros((B, HIDDEN_SIZE), jnp.float32)   # init_hidden(), broadcast to batch

    w_i2h, b_i2h, w_i2o, b_i2o = init_params(kp, INPUT_SIZE, HIDDEN_SIZE, OUTPUT_SIZE)
    wx, wh, b = prepare_params(w_i2h, b_i2h, w_i2o, b_i2o,
                               INPUT_SIZE, HIDDEN_SIZE, OUTPUT_SIZE)

    # --- single step (exact RNN.forward semantics) ---
    out1, hid1 = rnn_forward(x_seq[0], h0, wx, wh, b,
                             hidden_size=HIDDEN_SIZE, output_size=OUTPUT_SIZE)

    # --- full sequence in one kernel launch (chunked in-kernel time loop) ---
    out_seq, hT = rnn_sequence(x_seq, h0, wx, wh, b,
                               hidden_size=HIDDEN_SIZE, output_size=OUTPUT_SIZE)
    jax.block_until_ready((out1, hid1, out_seq, hT))

    # Pure-JAX references.
    comb0 = jnp.concatenate([x_seq[0], h0], axis=1)
    hid1_ref = comb0 @ w_i2h.T + b_i2h
    out1_ref = jax.nn.log_softmax(comb0 @ w_i2o.T + b_i2o, axis=1)

    h_ref = h0
    outs_ref = []
    for t in range(T):
        comb = jnp.concatenate([x_seq[t], h_ref], axis=1)
        new_h = comb @ w_i2h.T + b_i2h
        outs_ref.append(jax.nn.log_softmax(comb @ w_i2o.T + b_i2o, axis=1))
        h_ref = new_h
    outs_ref = jnp.stack(outs_ref)

    assert out1.shape == (B, OUTPUT_SIZE) and hid1.shape == (B, HIDDEN_SIZE)
    assert out_seq.shape == (T, B, OUTPUT_SIZE) and hT.shape == (B, HIDDEN_SIZE)
    assert jnp.allclose(hid1, hid1_ref, rtol=2e-2, atol=2e-2)
    assert jnp.allclose(out1, out1_ref, rtol=2e-2, atol=2e-2)
    assert jnp.allclose(hT, h_ref, rtol=2e-2, atol=2e-2)
    assert jnp.allclose(out_seq, outs_ref, rtol=2e-2, atol=2e-2)

    print("KERNEL_OK")
</pallas_src>

<mosaic_0001>
module attributes {stable_mosaic.version = 11 : i64} {
  func.func @rnn_seq_kernel(%arg0: i32, %arg1: memref<1x8x256xf32, #tpu.memory_space<vmem>>, %arg2: memref<128x256xf32, #tpu.memory_space<vmem>>, %arg3: memref<8x128xf32, #tpu.memory_space<vmem>>, %arg4: memref<1x8x128xf32, #tpu.memory_space<vmem>>, %arg5: memref<8x128xf32, #tpu.memory_space<vmem>>) attributes {dimension_semantics = [#tpu.dimension_semantics<arbitrary>], iteration_bounds = array<i64: 1>, scalar_prefetch = 0 : i64, scratch_operands = 0 : i64, tpu.core_type = #tpu.core_type<tc>, window_params = [{transform_indices = @transform_0, window_bounds = array<i64: 1, 8, 256>}, {pipeline_mode = #tpu.pipeline_mode<synchronous>, transform_indices = @transform_1, window_bounds = array<i64: 128, 256>}, {pipeline_mode = #tpu.pipeline_mode<synchronous>, transform_indices = @transform_2, window_bounds = array<i64: 8, 128>}, {transform_indices = @transform_3, window_bounds = array<i64: 1, 8, 128>}, {pipeline_mode = #tpu.pipeline_mode<synchronous>, transform_indices = @transform_4, window_bounds = array<i64: 8, 128>}]} {
    %c0_i32 = arith.constant 0 : i32
    %0 = arith.cmpi eq, %arg0, %c0_i32 : i32
    %1 = arith.extui %0 : i1 to i32
    %c0_i32_0 = arith.constant 0 : i32
    %2 = arith.cmpi ne, %1, %c0_i32_0 : i32
    scf.if %2 {
      %c0_13 = arith.constant 0 : index
      %c0_14 = arith.constant 0 : index
      %29 = vector.load %arg3[%c0_13, %c0_14] : memref<8x128xf32, #tpu.memory_space<vmem>>, vector<8x128xf32>
      %c0_15 = arith.constant 0 : index
      %c0_16 = arith.constant 0 : index
      %30 = vector.load %arg5[%c0_15, %c0_16] : memref<8x128xf32, #tpu.memory_space<vmem>>, vector<8x128xf32>
      tpu.vector_store %arg5[%c0_15, %c0_16], %29 {strides = array<i32>} : memref<8x128xf32, #tpu.memory_space<vmem>>, vector<8x128xf32>,
    } else {
    }
    %c0 = arith.constant 0 : index
    %c0_1 = arith.constant 0 : index
    %3 = vector.load %arg2[%c0, %c0_1] : memref<128x256xf32, #tpu.memory_space<vmem>>, vector<128x256xf32>
    %c0_2 = arith.constant 0 : index
    %c0_3 = arith.constant 0 : index
    %4 = vector.load %arg5[%c0_2, %c0_3] : memref<8x128xf32, #tpu.memory_space<vmem>>, vector<8x128xf32>
    %c0_i32_4 = arith.constant 0 : i32
    %5 = arith.index_cast %c0_i32_4 : i32 to index
    %c0_5 = arith.constant 0 : index
    %c0_6 = arith.constant 0 : index
    %6 = vector.load %arg1[%5, %c0_5, %c0_6] : memref<1x8x256xf32, #tpu.memory_space<vmem>>, vector<1x8x256xf32>
    %7 = vector.shape_cast %6 : vector<1x8x256xf32> to vector<8x256xf32>
    %cst = arith.constant dense<0.000000e+00> : vector<8x256xf32>
    %8 = tpu.matmul %4, %3, %cst {dimension_numbers = #tpu.dot_dimension_numbers<[1], [0], [0], [1], [0, 0, 1, 1], [], []>} : vector<8x128xf32>, vector<128x256xf32>, vector<8x256xf32> -> vector<8x256xf32>
    %9 = arith.addf %7, %8 : vector<8x256xf32>
    %10 = vector.extract_strided_slice %9 {offsets = [0, 0], sizes = [8, 128], strides = [1, 1]} : vector<8x256xf32> to vector<8x128xf32>
    %11 = vector.extract_strided_slice %9 {offsets = [0, 128], sizes = [8, 128], strides = [1, 1]} : vector<8x256xf32> to vector<8x128xf32>
    %cst_7 = arith.constant dense<0xFF800000> : vector<8xf32>
    %12 = vector.multi_reduction <maximumf>, %11, %cst_7 [1] : vector<8x128xf32> to vector<8xf32>
    %13 = vector.shape_cast %12 : vector<8xf32> to vector<8x1xf32>
    %14 = vector.broadcast %13 : vector<8x1xf32> to vector<8x128xf32>
    %15 = arith.subf %11, %14 : vector<8x128xf32>
    %16 = math.exp %15 : vector<8x128xf32>
    %cst_8 = arith.constant dense<0.000000e+00> : vector<8xf32>
    %17 = vector.multi_reduction <add>, %16, %cst_8 [1] : vector<8x128xf32> to vector<8xf32>
    %18 = vector.shape_cast %17 : vector<8xf32> to vector<8x1xf32>
    %19 = math.log %18 : vector<8x1xf32>
    %20 = vector.broadcast %13 : vector<8x1xf32> to vector<8x128xf32>
    %21 = arith.subf %11, %20 : vector<8x128xf32>
    %22 = vector.broadcast %19 : vector<8x1xf32> to vector<8x128xf32>
    %23 = arith.subf %21, %22 : vector<8x128xf32>
    %24 = arith.index_cast %c0_i32_4 : i32 to index
    %c0_9 = arith.constant 0 : index
    %c0_10 = arith.constant 0 : index
    %25 = vector.load %arg4[%24, %c0_9, %c0_10] : memref<1x8x128xf32, #tpu.memory_space<vmem>>, vector<1x8x128xf32>
    %26 = vector.shape_cast %25 : vector<1x8x128xf32> to vector<8x128xf32>
    %27 = vector.shape_cast %23 : vector<8x128xf32> to vector<1x8x128xf32>
    tpu.vector_store %arg4[%24, %c0_9, %c0_10], %27 {strides = array<i32>} : memref<1x8x128xf32, #tpu.memory_space<vmem>>, vector<1x8x128xf32>,
    %c1_i32 = arith.constant 1 : i32
    %c0_11 = arith.constant 0 : index
    %c0_12 = arith.constant 0 : index
    %28 = vector.load %arg5[%c0_11, %c0_12] : memref<8x128xf32, #tpu.memory_space<vmem>>, vector<8x128xf32>
    tpu.vector_store %arg5[%c0_11, %c0_12], %10 {strides = array<i32>} : memref<8x128xf32, #tpu.memory_space<vmem>>, vector<8x128xf32>,
    return
  }
  func.func @transform_0(%arg0: i32) -> (i32, i32, i32) {
    %c0_i32 = arith.constant 0 : i32
    %c0_i32_0 = arith.constant 0 : i32
    %c0_i32_1 = arith.constant 0 : i32
    return %arg0, %c0_i32, %c0_i32_0 : i32, i32, i32
  }
  func.func @transform_1(%arg0: i32) -> (i32, i32) {
    %c0_i32 = arith.constant 0 : i32
    %c0_i32_0 = arith.constant 0 : i32
    %c0_i32_1 = arith.constant 0 : i32
    return %c0_i32, %c0_i32_0 : i32, i32
  }
  func.func @transform_2(%arg0: i32) -> (i32, i32) {
    %c0_i32 = arith.constant 0 : i32
    %c0_i32_0 = arith.constant 0 : i32
    %c0_i32_1 = arith.constant 0 : i32
    return %c0_i32, %c0_i32_0 : i32, i32
  }
  func.func @transform_3(%arg0: i32) -> (i32, i32, i32) {
    %c0_i32 = arith.constant 0 : i32
    %c0_i32_0 = arith.constant 0 : i32
    %c0_i32_1 = arith.constant 0 : i32
    return %arg0, %c0_i32, %c0_i32_0 : i32, i32, i32
  }
  func.func @transform_4(%arg0: i32) -> (i32, i32) {
    %c0_i32 = arith.constant 0 : i32
    %c0_i32_0 = arith.constant 0 : i32
    %c0_i32_1 = arith.constant 0 : i32
    return %c0_i32, %c0_i32_0 : i32, i32
  }
}

</mosaic_0001>

<llo_original>
// kernel: rnn_sequence.1
$region0: #{rnn_sequence.1}
  #allocation0 [shape = 'u32[]', space=smem, size = 0x4, offset = 0x4, fixed_abs, tag = 'smem constant byte address 0x4 - core index']
  #allocation1 [shape = 'u32[72,128]{1,0:T(1,128)}', space=vmem, size = 0x9000, scoped, tag = 'internal scratch']
  %s0 = inlined_call_operand.vmem [shape: f32[1,8,256], index: 0, kind: input, shape index: {}]
  %s1 = inlined_call_operand.hbm [shape: f32[128,256], index: 1, kind: input, shape index: {}]
  %s2 = inlined_call_operand.vmem [shape: f32[8,128], index: 2, kind: input, shape index: {}]
  %s3 = inlined_call_operand.vmem [shape: f32[1,8,128], index: 3, kind: output, shape index: {0}]
  %s4 = inlined_call_operand.vmem [shape: f32[8,128], index: 4, kind: output, shape index: {1}]
  %5 = xla_tuple %s3, %s4
  %s6 = sld [smem:[#allocation0]]
  $region38: #{rnn_sequence.1} parent=0
    _
  %s8 = ssub.s32 1, %s6
  %s9 = scalar_select 0, %s8, %s6
  $region1: #{rnn_sequence.1} parent=0
    #allocation2 [shape = 'u8[131072]{0}', space=vmem, size = 0x20000, scoped, tag = 'input window, operand 1, single buffered']
    #allocation3 [shape = 's32[1]{0}', space=sflag, size = 0x4, scoped, tag = 'scoped memory for rnn_sequence.1']
    %10 = vsyncpa [#allocation3], 0
    // Predicated region
    $region2: #{rnn_sequence.1} parent=1 // pred_check
      _
    $region3: #{rnn_sequence.1} parent=1 // pred_check_branch
      %12 = sbr.rel (0) target = $region5
    $region4: #{rnn_sequence.1} parent=1 // pred_region
      _
    $region5: #{rnn_sequence.1} parent=1 // pred_fallthru
      _
    // Predicated region
    $region6: #{rnn_sequence.1} parent=1 // pred_check
      _
    $region7: #{rnn_sequence.1} parent=1 // pred_check_branch
      %14 = sbr.rel (0) target = $region9
    $region8: #{rnn_sequence.1} parent=1 // pred_region
      %16 = vsyncadd [#allocation3], 0
      %s17 = sshll.u32 %s1, 4
      %s18 = int_to_ptr.hbm [resolvable:$true] %s17
      %s19 = sshll.u32 [#allocation2], 4
      %s20 = int_to_ptr.vmem [resolvable:$true] %s19
      %25 = dma.hbm_to_vmem [thread:$0]  %s18, 4096, %s20, [#allocation3], 256, 256, 16
    $region9: #{rnn_sequence.1} parent=1 // pred_fallthru
      _
    // Predicated region
    $region10: #{rnn_sequence.1} parent=1 // pred_check
      _
    $region11: #{rnn_sequence.1} parent=1 // pred_check_branch
      %27 = sbr.rel (0) target = $region13
    $region12: #{rnn_sequence.1} parent=1 // pred_region
      _
    $region13: #{rnn_sequence.1} parent=1 // pred_fallthru
      _
    // Predicated region
    $region14: #{rnn_sequence.1} parent=1 // pred_check
      _
    $region15: #{rnn_sequence.1} parent=1 // pred_check_branch
      %29 = sbr.rel (0) target = $region17
    $region16: #{rnn_sequence.1} parent=1 // pred_region
      %31 = dma.done [#allocation3], 4096
    $region17: #{rnn_sequence.1} parent=1 // pred_fallthru
      _
    %p32 = scmp.eq.s32.totalorder 0, 0
    // Predicated region
    $region18: #{rnn_sequence.1} parent=1 // pred_check
      %p33 = pneg %p32
    $region19: #{rnn_sequence.1} parent=1 // pred_check_branch
      %35 = sbr.rel (%p33) target = $region21
    $region20: #{rnn_sequence.1} parent=1 // pred_region
      %v36 = vld [vmem:[%s2] sm:$0xff]
      %37 = vst [vmem:[%s4] sm:$0xff] %v36
    $region21: #{rnn_sequence.1} parent=1 // pred_fallthru
      _
    %v38 = vld [vmem:[#allocation2] sm:$0xff]
    %v39 = vld [vmem:[#allocation2 + $0x8] sm:$0xff]
    %v40 = vld [vmem:[#allocation2 + $0x10] sm:$0xff]
    %v41 = vld [vmem:[#allocation2 + $0x18] sm:$0xff]
    %v42 = vld [vmem:[#allocation2 + $0x20] sm:$0xff]
    %v43 = vld [vmem:[#allocation2 + $0x28] sm:$0xff]
    %v44 = vld [vmem:[#allocation2 + $0x30] sm:$0xff]
    %v45 = vld [vmem:[#allocation2 + $0x38] sm:$0xff]
    %v46 = vld [vmem:[#allocation2 + $0x40] sm:$0xff]
    %v47 = vld [vmem:[#allocation2 + $0x48] sm:$0xff]
    %v48 = vld [vmem:[#allocation2 + $0x50] sm:$0xff]
    %v49 = vld [vmem:[#allocation2 + $0x58] sm:$0xff]
    %v50 = vld [vmem:[#allocation2 + $0x60] sm:$0xff]
    %v51 = vld [vmem:[#allocation2 + $0x68] sm:$0xff]
    %v52 = vld [vmem:[#allocation2 + $0x70] sm:$0xff]
    %v53 = vld [vmem:[#allocation2 + $0x78] sm:$0xff]
    %v54 = vld [vmem:[#allocation2 + $0x80] sm:$0xff]
    %v55 = vld [vmem:[#allocation2 + $0x88] sm:$0xff]
    %v56 = vld [vmem:[#allocation2 + $0x90] sm:$0xff]
    %v57 = vld [vmem:[#allocation2 + $0x98] sm:$0xff]
    %v58 = vld [vmem:[#allocation2 + $0xa0] sm:$0xff]
    %v59 = vld [vmem:[#allocation2 + $0xa8] sm:$0xff]
    %v60 = vld [vmem:[#allocation2 + $0xb0] sm:$0xff]
    %v61 = vld [vmem:[#allocation2 + $0xb8] sm:$0xff]
    %v62 = vld [vmem:[#allocation2 + $0xc0] sm:$0xff]
    %v63 = vld [vmem:[#allocation2 + $0xc8] sm:$0xff]
    %v64 = vld [vmem:[#allocation2 + $0xd0] sm:$0xff]
    %v65 = vld [vmem:[#allocation2 + $0xd8] sm:$0xff]
    %v66 = vld [vmem:[#allocation2 + $0xe0] sm:$0xff]
    %v67 = vld [vmem:[#allocation2 + $0xe8] sm:$0xff]
    %v68 = vld [vmem:[#allocation2 + $0xf0] sm:$0xff]
    %v69 = vld [vmem:[#allocation2 + $0xf8] sm:$0xff]
    %v70 = vld [vmem:[%s4] sm:$0xff]
    %v71 = vld [vmem:[%s0] sm:$0xff]
    %v72 = vld [vmem:[%s0 + $0x8] sm:$0xff]
    %73 = vmatpush.msra.mxu0 %v68
    %74 = vmatpush.msra.mxu0 %v66
    %75 = vmatpush.msra.mxu0 %v64
    %76 = vmatpush.msra.mxu0 %v62
    %77 = vmatpush.msra.mxu0 %v60
    %78 = vmatpush.msra.mxu0 %v58
    %79 = vmatpush.msra.mxu0 %v56
    %80 = vmatpush.msra.mxu0 %v54
    %81 = vmatpush.msra.mxu0 %v52
    %82 = vmatpush.msra.mxu0 %v50
    %83 = vmatpush.msra.mxu0 %v48
    %84 = vmatpush.msra.mxu0 %v46
    %85 = vmatpush.msra.mxu0 %v44
    %86 = vmatpush.msra.mxu0 %v42
    %87 = vmatpush.msra.mxu0 %v40
    %88 = vmatpush.msra.mxu0 %v38
    %89 = vmatmul.f32.gmra.mxu0 %v70
    %v90 = vpop.f32.mrf.mxu0
    %v91 = vadd.f32 0.0, %v90
    %92 = vdwg.mxu0
    %93 = vmatpush.msra.mxu0 %v69
    %94 = vmatpush.msra.mxu0 %v67
    %95 = vmatpush.msra.mxu0 %v65
    %96 = vmatpush.msra.mxu0 %v63
    %97 = vmatpush.msra.mxu0 %v61
    %98 = vmatpush.msra.mxu0 %v59
    %99 = vmatpush.msra.mxu0 %v57
    %100 = vmatpush.msra.mxu0 %v55
    %101 = vmatpush.msra.mxu0 %v53
    %102 = vmatpush.msra.mxu0 %v51
    %103 = vmatpush.msra.mxu0 %v49
    %104 = vmatpush.msra.mxu0 %v47
    %105 = vmatpush.msra.mxu0 %v45
    %106 = vmatpush.msra.mxu0 %v43
    %107 = vmatpush.msra.mxu0 %v41
    %108 = vmatpush.msra.mxu0 %v39
    %109 = vmatmul.f32.gmra.mxu0 %v70
    %v110 = vpop.f32.mrf.mxu0
    %v111 = vadd.f32 0.0, %v110
    %112 = vdwg.mxu0
    %v113 = vadd.f32 %v71, %v91
    %v114 = vadd.f32 %v72, %v111
    %115 = vmax.xlane.f32.xlu0 %v114
    %v116 = vpop.xlane.xlu0 %115
    %v117 = vsub.f32 %v114, %v116
    %v118 = vmul.f32 %v117, 1.442695
    %v119 = vpow.pop %v118
    %120 = vadd.xlane.f32.xlu0 %v119
    %v121 = vpop.xlane.xlu0 %120
    %v122 = vlog2.pop %v121
    %v123 = vmul.f32 %v122, 0.6931472
    %v124 = vsub.f32 %v117, %v123
    %125 = vst [vmem:[%s3] sm:$0xff] %v124
    %126 = vst [vmem:[%s4] sm:$0xff] %v113
    // Predicated region
    $region22: #{rnn_sequence.1} parent=1 // pred_check
      _
    $region23: #{rnn_sequence.1} parent=1 // pred_check_branch
      %128 = sbr.rel (0) target = $region25
    $region24: #{rnn_sequence.1} parent=1 // pred_region
      _
    $region25: #{rnn_sequence.1} parent=1 // pred_fallthru
      _
    // Predicated region
    $region26: #{rnn_sequence.1} parent=1 // pred_check
      _
    $region27: #{rnn_sequence.1} parent=1 // pred_check_branch
      %130 = sbr.rel (0) target = $region29
    $region28: #{rnn_sequence.1} parent=1 // pred_region
      _
    $region29: #{rnn_sequence.1} parent=1 // pred_fallthru
      _
    // Predicated region
    $region30: #{rnn_sequence.1} parent=1 // pred_check
      _
    $region31: #{rnn_sequence.1} parent=1 // pred_check_branch
      %132 = sbr.rel (0) target = $region33
    $region32: #{rnn_sequence.1} parent=1 // pred_region
      _
    $region33: #{rnn_sequence.1} parent=1 // pred_fallthru
      _
    // Predicated region
    $region34: #{rnn_sequence.1} parent=1 // pred_check
      _
    $region35: #{rnn_sequence.1} parent=1 // pred_check_branch
      %134 = sbr.rel (0) target = $region37
    $region36: #{rnn_sequence.1} parent=1 // pred_region
      _
    $region37: #{rnn_sequence.1} parent=1 // pred_fallthru
      _
    %135 = vsyncpa [#allocation3], 1

</llo_original>
